<compile_context>
chip_gen: v7x
topology: tpu7x:2x2x1
jax: 0.10.0
libtpu: 0.0.40
codegen_flags: <defaults>
</compile_context>

<pallas_src>
import jax
import jax.numpy as jnp
from jax.experimental import pallas as pl
from jax.experimental.pallas import tpu as pltpu


def _round_up(x: int, m: int) -> int:
    return pl.cdiv(x, m) * m


def coral_kernel(x_ref, w_ref, b_ref, o_ref):
    # x_ref: (TB, D_in)  w_ref: (1, D_in)  b_ref: (1, D_out)  o_ref: (TB, D_out)
    # VPU broadcast-multiply in the input dtype; f32 accumulation for the
    # lane (XLU) reduction; bias broadcast-add; masked store of the narrow
    # (TB, D_out) tile (store slot is nowhere near binding here).
    prod = x_ref[...] * w_ref[...]
    s = jnp.sum(prod, axis=-1, keepdims=True, dtype=jnp.float32)    # (TB, 1)
    o_ref[...] = (s + b_ref[...].astype(jnp.float32)).astype(o_ref.dtype)


def _vmem_budget_bytes():
    """Generation-aware (tile budget, vmem_limit_bytes)."""
    cap = None
    try:
        info = pltpu.get_tpu_info()
        cap = getattr(info, "vmem_capacity_bytes", None)
    except Exception:
        cap = None
    if cap is None:
        cap = 64 * 1024 * 1024                 # conservative: v7x per-TC VMEM
    if cap >= 96 * 1024 * 1024:                # v5e / v6e: 128 MiB physical
        return 48 * 1024 * 1024, 64 * 1024 * 1024
    # v7x: 64 MiB physical per TensorCore -> leave headroom.
    return 36 * 1024 * 1024, 48 * 1024 * 1024


def _choose_batch_tile(B, D_in, D_out, in_itemsize, out_itemsize,
                       vmem_budget, min_grid_steps=2):
    """Batch tile: multiple of 8 (or == B); ~2 MiB of x per grid step."""
    # Only the x and out tiles are double-buffered; w / b have a constant
    # block index and stay single-buffered, VMEM-resident across steps.
    per_row = 2 * (in_itemsize * D_in + out_itemsize * D_out)
    tb_vmem = max(8, (vmem_budget // per_row) // 8 * 8)
    # Amortize ~0.35us per-grid-step overhead: >= ~2 MiB of x per step.
    tb_amort = max(8, _round_up(pl.cdiv(2 * 1024 * 1024,
                                        max(1, in_itemsize * D_in)), 8))
    tb = min(tb_vmem, tb_amort)
    # Keep >= min_grid_steps grid steps when B allows it (feed both v7x TCs).
    if B >= min_grid_steps * 8:
        tb = min(tb, max(8, (_round_up(B, 8) // min_grid_steps) // 8 * 8))
    if B <= tb:
        return B            # single block spanning full batch (block == array dim)
    return tb


def coral_layer(x, w, b, out_dtype=None):
    """CORAL head forward.

    x: (B, dims_in)          activations
    w: (1, dims_in)          nn.Linear(dims_in, 1, bias=False).weight layout
    b: (dims_out,)           coral_b
    returns (B, dims_out)
    """
    B, D_in = x.shape
    D_out = b.shape[0]
    out_dtype = out_dtype or x.dtype

    budget, vmem_limit = _vmem_budget_bytes()
    in_itemsize = jnp.dtype(x.dtype).itemsize
    out_itemsize = jnp.dtype(out_dtype).itemsize
    TB = _choose_batch_tile(B, D_in, D_out, in_itemsize, out_itemsize, budget)

    b_row = b.reshape(1, D_out).astype(jnp.float32)

    grid = (pl.cdiv(B, TB),)   # ragged last block is masked by Pallas

    out = pl.pallas_call(
        coral_kernel,
        out_shape=jax.ShapeDtypeStruct((B, D_out), out_dtype),
        grid=grid,
        in_specs=[
            # x: tiled over batch; pipelined / double-buffered by Pallas.
            pl.BlockSpec((TB, D_in), lambda i: (i, 0)),
            # w and b: constant block index -> VMEM-resident across steps.
            pl.BlockSpec((1, D_in), lambda i: (0, 0)),
            pl.BlockSpec((1, D_out), lambda i: (0, 0)),
        ],
        out_specs=pl.BlockSpec((TB, D_out), lambda i: (i, 0)),
        compiler_params=pltpu.CompilerParams(
            dimension_semantics=("parallel",),
            vmem_limit_bytes=vmem_limit,
        ),
        cost_estimate=pl.CostEstimate(
            flops=2 * B * D_in + B * D_out,
            transcendentals=0,
            bytes_accessed=(in_itemsize * (B * D_in + D_in)
                            + 4 * D_out
                            + out_itemsize * B * D_out),
        ),
    )(x, w, b_row)

    return out


if __name__ == "__main__":
    B, dims_in, dims_out = 8, 32, 8

    key = jax.random.PRNGKey(0)
    kx, kw = jax.random.split(key)

    x = jax.random.normal(kx, (B, dims_in), dtype=jnp.float32)
    # coral_w: nn.Linear(dims_in, 1, bias=False) weight, shape (1, dims_in),
    # passed lane-dense (feature on the last axis) to the kernel.
    w = jax.random.normal(kw, (1, dims_in), dtype=jnp.float32) * 0.1
    # coral_b is zero-initialized in the module; use a nonzero ramp so the
    # broadcast-add is actually exercised.
    b = jnp.arange(dims_out, dtype=jnp.float32) * 0.5

    out = coral_layer(x, w, b)
    out = jax.block_until_ready(out)

    # Reference in plain JAX (mirrors the PyTorch forward exactly).
    ref = x @ w.T + b          # (B, 1) + (dims_out,) -> (B, dims_out)
    assert out.shape == (B, dims_out), out.shape
    assert jnp.allclose(out, ref, atol=1e-5, rtol=1e-5), float(
        jnp.max(jnp.abs(out - ref)))

    print("KERNEL_OK")
</pallas_src>

<mosaic_0001>
module attributes {stable_mosaic.version = 11 : i64} {
  func.func @coral_kernel(%arg0: i32, %arg1: memref<8x32xf32, #tpu.memory_space<vmem>>, %arg2: memref<1x32xf32, #tpu.memory_space<vmem>>, %arg3: memref<1x8xf32, #tpu.memory_space<vmem>>, %arg4: memref<8x8xf32, #tpu.memory_space<vmem>>) attributes {dimension_semantics = [#tpu.dimension_semantics<parallel>], iteration_bounds = array<i64: 1>, scalar_prefetch = 0 : i64, scratch_operands = 0 : i64, tpu.core_type = #tpu.core_type<tc>, window_params = [{transform_indices = @transform_0, window_bounds = array<i64: 8, 32>}, {pipeline_mode = #tpu.pipeline_mode<synchronous>, transform_indices = @transform_1, window_bounds = array<i64: 1, 32>}, {pipeline_mode = #tpu.pipeline_mode<synchronous>, transform_indices = @transform_2, window_bounds = array<i64: 1, 8>}, {transform_indices = @transform_3, window_bounds = array<i64: 8, 8>}]} {
    %c0 = arith.constant 0 : index
    %c0_0 = arith.constant 0 : index
    %0 = vector.load %arg1[%c0, %c0_0] : memref<8x32xf32, #tpu.memory_space<vmem>>, vector<8x32xf32>
    %c0_1 = arith.constant 0 : index
    %c0_2 = arith.constant 0 : index
    %1 = vector.load %arg2[%c0_1, %c0_2] : memref<1x32xf32, #tpu.memory_space<vmem>>, vector<1x32xf32>
    %2 = vector.broadcast %1 : vector<1x32xf32> to vector<8x32xf32>
    %3 = arith.mulf %0, %2 : vector<8x32xf32>
    %cst = arith.constant dense<0.000000e+00> : vector<8xf32>
    %4 = vector.multi_reduction <add>, %3, %cst [1] : vector<8x32xf32> to vector<8xf32>
    %5 = vector.shape_cast %4 : vector<8xf32> to vector<8x1xf32>
    %c0_3 = arith.constant 0 : index
    %c0_4 = arith.constant 0 : index
    %6 = vector.load %arg3[%c0_3, %c0_4] : memref<1x8xf32, #tpu.memory_space<vmem>>, vector<1x8xf32>
    %7 = vector.broadcast %5 : vector<8x1xf32> to vector<8x8xf32>
    %8 = vector.broadcast %6 : vector<1x8xf32> to vector<8x8xf32>
    %9 = arith.addf %7, %8 : vector<8x8xf32>
    %c0_5 = arith.constant 0 : index
    %c0_6 = arith.constant 0 : index
    %10 = vector.load %arg4[%c0_5, %c0_6] : memref<8x8xf32, #tpu.memory_space<vmem>>, vector<8x8xf32>
    tpu.vector_store %arg4[%c0_5, %c0_6], %9 {strides = array<i32>} : memref<8x8xf32, #tpu.memory_space<vmem>>, vector<8x8xf32>,
    return
  }
  func.func @transform_0(%arg0: i32) -> (i32, i32) {
    %c0_i32 = arith.constant 0 : i32
    %c0_i32_0 = arith.constant 0 : i32
    return %arg0, %c0_i32 : i32, i32
  }
  func.func @transform_1(%arg0: i32) -> (i32, i32) {
    %c0_i32 = arith.constant 0 : i32
    %c0_i32_0 = arith.constant 0 : i32
    %c0_i32_1 = arith.constant 0 : i32
    return %c0_i32, %c0_i32_0 : i32, i32
  }
  func.func @transform_2(%arg0: i32) -> (i32, i32) {
    %c0_i32 = arith.constant 0 : i32
    %c0_i32_0 = arith.constant 0 : i32
    %c0_i32_1 = arith.constant 0 : i32
    return %c0_i32, %c0_i32_0 : i32, i32
  }
  func.func @transform_3(%arg0: i32) -> (i32, i32) {
    %c0_i32 = arith.constant 0 : i32
    %c0_i32_0 = arith.constant 0 : i32
    return %arg0, %c0_i32 : i32, i32
  }
}

</mosaic_0001>

<llo_original>
// kernel: tpu_custom_call.1
$region0: #{tpu_custom_call.1}
  #allocation0 [shape = 'u32[]', space=smem, size = 0x4, offset = 0x4, fixed_abs, tag = 'smem constant byte address 0x4 - core index']
  #allocation1 [shape = 'u32[144,128]{1,0:T(1,128)}', space=vmem, size = 0x12000, scoped, tag = 'internal scratch']
  %s0 = inlined_call_operand.hbm [shape: f32[8,32], index: 0, kind: input, shape index: {}]
  %s1 = inlined_call_operand.vmem [shape: f32[1,32], index: 1, kind: input, shape index: {}]
  %s2 = inlined_call_operand.vmem [shape: f32[1,8], index: 2, kind: input, shape index: {}]
  %s3 = inlined_call_operand.hbm [shape: f32[8,8], index: 3, kind: output, shape index: {}]
  %s4 = sld [smem:[#allocation0]]
  $region26: #{tpu_custom_call.1} parent=0
    _
  %s6 = ssub.s32 1, %s4
  %s7 = scalar_select 0, %s6, %s4
  $region1: #{tpu_custom_call.1} parent=0
    #allocation2 [shape = 'u8[4096]{0}', space=vmem, size = 0x1000, scoped, tag = 'input window, operand 0, single buffered']
    #allocation3 [shape = 's32[1]{0}', space=sflag, size = 0x4, scoped, tag = 'scoped memory for tpu_custom_call.1']
    #allocation4 [shape = 's32[1]{0}', space=sflag, size = 0x4, scoped, tag = 'scoped memory for tpu_custom_call.1']
    #allocation5 [shape = 'u8[4096]{0}', space=vmem, size = 0x1000, scoped, tag = 'output window, operand 0, single buffered']
    %8 = vsyncpa [#allocation3], 0
    %9 = vsyncpa [#allocation4], 0
    // Predicated region
    $region2: #{tpu_custom_call.1} parent=1 // pred_check
      _
    $region3: #{tpu_custom_call.1} parent=1 // pred_check_branch
      %11 = sbr.rel (0) target = $region5
    $region4: #{tpu_custom_call.1} parent=1 // pred_region
      %s13 = ssub.s32 128, 128
      %14 = vsyncadd [#allocation3], %s13
      %s16 = sshll.u32 [#allocation2], 4
      %s17 = int_to_ptr.vmem [resolvable:$true] %s16
      %19 = dma.hbm_to_vmem [thread:$0]  %s0, 128, %s17, [#allocation3]
    $region5: #{tpu_custom_call.1} parent=1 // pred_fallthru
      _
    // Predicated region
    $region6: #{tpu_custom_call.1} parent=1 // pred_check
      _
    $region7: #{tpu_custom_call.1} parent=1 // pred_check_branch
      %21 = sbr.rel (0) target = $region9
    $region8: #{tpu_custom_call.1} parent=1 // pred_region
      _
    $region9: #{tpu_custom_call.1} parent=1 // pred_fallthru
      _
    // Predicated region
    $region10: #{tpu_custom_call.1} parent=1 // pred_check
      _
    $region11: #{tpu_custom_call.1} parent=1 // pred_check_branch
      %23 = sbr.rel (0) target = $region13
    $region12: #{tpu_custom_call.1} parent=1 // pred_region
      _
    $region13: #{tpu_custom_call.1} parent=1 // pred_fallthru
      _
    // Predicated region
    $region14: #{tpu_custom_call.1} parent=1 // pred_check
      _
    $region15: #{tpu_custom_call.1} parent=1 // pred_check_branch
      %25 = sbr.rel (0) target = $region17
    $region16: #{tpu_custom_call.1} parent=1 // pred_region
      %26 = dma.done [#allocation3], 128
    $region17: #{tpu_custom_call.1} parent=1 // pred_fallthru
      _
    %v27 = vld [vmem:[#allocation2] sm:$0xff]
    %v28 = vld [vmem:[%s1] sm:$0x1]
    %v30 = vlaneseq
    %v31 = vshrl.u32 %v30, 7
    %v32 = vsub.s32 0, %v31
    %v33 = vrot.slane %v28, %v32
    %v35 = vmul.f32 %v27, %v33
    %vm36 = vcmask 261120
    %v37 = vsel %vm36, %v35, 0.0
    %38 = vadd.xlane.f32.xlu0 %v37
    %v39 = vpop.xlane.xlu0 %38
    %v40 = vld [vmem:[%s2] sm:$0x1]
    %v42 = vlaneseq
    %v43 = vshrl.u32 %v42, 7
    %v44 = vsub.s32 0, %v43
    %v45 = vrot.slane %v40, %v44
    %v47 = vadd.f32 %v39, %v45
    %vm48 = vcmask 64512
    %49 = vst.msk [vmem:[#allocation5] sm:$0xff] %vm48, %v47
    // Predicated region
    $region18: #{tpu_custom_call.1} parent=1 // pred_check
      _
    $region19: #{tpu_custom_call.1} parent=1 // pred_check_branch
      %51 = sbr.rel (0) target = $region21
    $region20: #{tpu_custom_call.1} parent=1 // pred_region
      %s53 = ssub.s32 128, 128
      %54 = vsyncadd [#allocation4], %s53
      %s56 = sshll.u32 [#allocation5], 4
      %s57 = int_to_ptr.vmem [resolvable:$true] %s56
      %59 = dma.vmem_to_hbm [thread:$0]  %s57, 128, %s3, [#allocation4]
    $region21: #{tpu_custom_call.1} parent=1 // pred_fallthru
      _
    // Predicated region
    $region22: #{tpu_custom_call.1} parent=1 // pred_check
      _
    $region23: #{tpu_custom_call.1} parent=1 // pred_check_branch
      %61 = sbr.rel (0) target = $region25
    $region24: #{tpu_custom_call.1} parent=1 // pred_region
      %62 = dma.done [#allocation4], 128
    $region25: #{tpu_custom_call.1} parent=1 // pred_fallthru
      _
    %63 = vsyncpa [#allocation3], 1
    %64 = vsyncpa [#allocation4], 1

</llo_original>
